<compile_context>
chip_gen: v5e
topology: v5e:2x2
jax: 0.10.0
libtpu: 0.0.40
codegen_flags: <defaults>
</compile_context>

<pallas_src>
import functools

import jax
import jax.numpy as jnp
from jax.experimental import pallas as pl
from jax.experimental.pallas import tpu as pltpu


# ----------------------------------------------------------------------------
# In-kernel helpers (operate on values already resident in VMEM).
# ----------------------------------------------------------------------------
def _group_norm_silu(x, gamma, beta, groups, eps):
    """GroupNorm (stats in f32, GroupNorm32-style) followed by SiLU.

    x: (C, L) float32, gamma/beta: (C, 1) float32. Returns (C, L) float32.
    Group aggregation / broadcast-back is done with tiny one-hot matmuls built
    from iotas, avoiding sublane<->lane reshapes.
    """
    C, L = x.shape
    cg = C // groups
    s1 = jnp.sum(x, axis=1, keepdims=True)          # (C, 1) per-channel sum
    s2 = jnp.sum(x * x, axis=1, keepdims=True)      # (C, 1) per-channel sum sq
    stats = jnp.concatenate([s1, s2], axis=1)       # (C, 2)

    gi = jax.lax.broadcasted_iota(jnp.int32, (groups, C), 0)
    ci = jax.lax.broadcasted_iota(jnp.int32, (groups, C), 1)
    cid = ci if cg == 1 else ci // cg
    agg = (cid == gi).astype(jnp.float32)           # (G, C) group-sum matrix

    gi2 = jax.lax.broadcasted_iota(jnp.int32, (C, groups), 1)
    ci2 = jax.lax.broadcasted_iota(jnp.int32, (C, groups), 0)
    cid2 = ci2 if cg == 1 else ci2 // cg
    scat = (cid2 == gi2).astype(jnp.float32)        # (C, G) broadcast-back matrix

    gstats = jnp.dot(agg, stats, preferred_element_type=jnp.float32)  # (G, 2)
    cnt = float(cg * L)
    mean = gstats[:, 0:1] / cnt
    var = gstats[:, 1:2] / cnt - mean * mean
    inv = jax.lax.rsqrt(var + eps)
    mi = jnp.dot(scat, jnp.concatenate([mean, inv], axis=1),
                 preferred_element_type=jnp.float32)                  # (C, 2)
    y = (x - mi[:, 0:1]) * mi[:, 1:2] * gamma + beta
    return y * jax.nn.sigmoid(y)                    # SiLU


def _conv3x3_stacked(y, w_ref, cb_ref, not_first, not_last, W):
    """3x3 'same' conv as a single stacked MXU matmul.

    y:      (Cin, H*W) activation (native dtype)
    w_ref:  (Cout, 9*Cin) ref; columns [k*Cin:(k+1)*Cin] hold tap k = ky*3+kx
            of the PyTorch (Cout, Cin, 3, 3) weight.
    cb_ref: (Cout, 1) bias ref.
    not_first / not_last: (1, H*W) bool lane masks for left/right image edges.
    Returns (Cout, H*W) float32 (f32 accumulation on the MXU).
    """
    Cin, HW = y.shape
    zero = jnp.zeros((), y.dtype)
    taps = []
    for k in range(9):
        oy, ox = k // 3 - 1, k % 3 - 1
        s = oy * W + ox                  # shift in the flattened spatial index
        if s > 0:
            shifted = jnp.concatenate(
                [y[:, s:], jnp.zeros((Cin, s), y.dtype)], axis=1)
        elif s < 0:
            shifted = jnp.concatenate(
                [jnp.zeros((Cin, -s), y.dtype), y[:, :HW + s]], axis=1)
        else:
            shifted = y
        if ox == 1:
            shifted = jnp.where(not_last, shifted, zero)
        elif ox == -1:
            shifted = jnp.where(not_first, shifted, zero)
        taps.append(shifted)
    y9 = jnp.concatenate(taps, axis=0)               # (9*Cin, H*W)
    out = jnp.dot(w_ref[...], y9, preferred_element_type=jnp.float32)
    return out + cb_ref[...].astype(jnp.float32)


# ----------------------------------------------------------------------------
# Pallas kernels.
# ----------------------------------------------------------------------------
def _emb_linear_kernel(e_ref, w_ref, b_ref, o_ref):
    """emb_layers: SiLU -> Linear, all batch rows at once (tiny)."""
    e = e_ref[...].astype(jnp.float32)
    e = e * jax.nn.sigmoid(e)
    o = jnp.dot(e.astype(e_ref.dtype), w_ref[...],
                preferred_element_type=jnp.float32)
    o_ref[...] = (o + b_ref[...].astype(jnp.float32)).astype(o_ref.dtype)


def _res_block_kernel(*refs, groups, eps, H, W, skip_conv):
    """Fused: GN+SiLU+Conv3x3 -> +emb -> GN+SiLU+(Dropout)+Conv3x3 -> skip+res.

    One image (batch element) per grid step.
    """
    if skip_conv:
        (x_ref, e_ref, g1_ref, b1_ref, w1_ref, cb1_ref,
         g2_ref, b2_ref, w2_ref, cb2_ref, ws_ref, bs_ref, o_ref) = refs
    else:
        (x_ref, e_ref, g1_ref, b1_ref, w1_ref, cb1_ref,
         g2_ref, b2_ref, w2_ref, cb2_ref, o_ref) = refs

    HW = H * W
    # Edge-column masks, shared by both convs.
    col = jax.lax.broadcasted_iota(jnp.int32, (1, HW), 1) % W
    not_first = col != 0          # valid positions when a tap looks left
    not_last = col != (W - 1)     # valid positions when a tap looks right

    # --- in_layers: GroupNorm -> SiLU -> Conv3x3 ----------------------------
    x = x_ref[0].astype(jnp.float32)                            # (Cin, H*W)
    y1 = _group_norm_silu(x, g1_ref[...].astype(jnp.float32),
                          b1_ref[...].astype(jnp.float32), groups, eps)
    y1 = y1.astype(x_ref.dtype)   # conv runs in the model's native dtype
    h = _conv3x3_stacked(y1, w1_ref, cb1_ref, not_first, not_last, W)  # f32

    # --- h = h + emb_out[..., None] -----------------------------------------
    h = h + e_ref[0].astype(jnp.float32)                        # (Cout, 1) bc

    # --- out_layers: GroupNorm -> SiLU -> Dropout -> Conv3x3 ----------------
    y2 = _group_norm_silu(h, g2_ref[...].astype(jnp.float32),
                          b2_ref[...].astype(jnp.float32), groups, eps)
    # TODO(synk): nn.Dropout is treated as inference-mode identity (no RNG).
    y2 = y2.astype(x_ref.dtype)
    out = _conv3x3_stacked(y2, w2_ref, cb2_ref, not_first, not_last, W)  # f32

    # --- skip connection + residual -----------------------------------------
    if skip_conv:
        skip = jnp.dot(ws_ref[...], x_ref[0],
                       preferred_element_type=jnp.float32)
        skip = skip + bs_ref[...].astype(jnp.float32)
    else:
        skip = x
    o_ref[0] = (skip + out).astype(o_ref.dtype)


# ----------------------------------------------------------------------------
# Wrapper.
# ----------------------------------------------------------------------------
def res_block_forward(x, emb, params, *, n_groups=32, eps=1e-5):
    """Forward pass of the default-config ResBlock. x: [N,Cin,H,W], emb: [N,E]."""
    N, Cin, H, W = x.shape
    Cout = params["conv1_w"].shape[0]
    E = emb.shape[1]
    HW = H * W
    assert Cin % n_groups == 0 and Cout % n_groups == 0

    xf = x.reshape(N, Cin, HW)                       # free, layout-preserving

    # Stacked 3x3 conv weights: (Cout, 9*Cin), columns tap-major then cin,
    # matching the in-kernel sublane stacking order of shifted activations.
    w1 = jnp.transpose(params["conv1_w"], (0, 2, 3, 1)).reshape(Cout, 9 * Cin)
    cb1 = params["conv1_b"].reshape(Cout, 1)
    w2 = jnp.transpose(params["conv2_w"], (0, 2, 3, 1)).reshape(Cout, 9 * Cout)
    cb2 = params["conv2_b"].reshape(Cout, 1)
    g1 = params["gn1_w"].astype(jnp.float32).reshape(Cin, 1)
    b1 = params["gn1_b"].astype(jnp.float32).reshape(Cin, 1)
    g2 = params["gn2_w"].astype(jnp.float32).reshape(Cout, 1)
    b2 = params["gn2_b"].astype(jnp.float32).reshape(Cout, 1)

    # --- emb_layers: SiLU + Linear (tiny, whole batch in one step) ----------
    we_t = params["emb_w"].T                         # (E, Cout)
    be = params["emb_b"].reshape(1, Cout)
    emb_out = pl.pallas_call(
        _emb_linear_kernel,
        out_shape=jax.ShapeDtypeStruct((N, Cout), x.dtype),
        grid=(1,),
        in_specs=[
            pl.BlockSpec((N, E), lambda i: (0, 0)),
            pl.BlockSpec((E, Cout), lambda i: (0, 0)),
            pl.BlockSpec((1, Cout), lambda i: (0, 0)),
        ],
        out_specs=pl.BlockSpec((N, Cout), lambda i: (0, 0)),
    )(emb, we_t, be)
    emb_out3 = emb_out.reshape(N, Cout, 1)

    # --- fused main path: in_layers + emb add + out_layers + skip + residual
    skip_conv = (Cout != Cin)
    in_specs = [
        pl.BlockSpec((1, Cin, HW), lambda n: (n, 0, 0)),     # x
        pl.BlockSpec((1, Cout, 1), lambda n: (n, 0, 0)),     # emb_out
        pl.BlockSpec((Cin, 1), lambda n: (0, 0)),            # gn1 gamma
        pl.BlockSpec((Cin, 1), lambda n: (0, 0)),            # gn1 beta
        pl.BlockSpec((Cout, 9 * Cin), lambda n: (0, 0)),     # conv1 weight
        pl.BlockSpec((Cout, 1), lambda n: (0, 0)),           # conv1 bias
        pl.BlockSpec((Cout, 1), lambda n: (0, 0)),           # gn2 gamma
        pl.BlockSpec((Cout, 1), lambda n: (0, 0)),           # gn2 beta
        pl.BlockSpec((Cout, 9 * Cout), lambda n: (0, 0)),    # conv2 weight
        pl.BlockSpec((Cout, 1), lambda n: (0, 0)),           # conv2 bias
    ]
    args = [xf, emb_out3, g1, b1, w1, cb1, g2, b2, w2, cb2]
    if skip_conv:
        ws = params["skip_w"].reshape(Cout, Cin)             # 1x1 conv weight
        bs = params["skip_b"].reshape(Cout, 1)
        in_specs += [pl.BlockSpec((Cout, Cin), lambda n: (0, 0)),
                     pl.BlockSpec((Cout, 1), lambda n: (0, 0))]
        args += [ws, bs]

    out = pl.pallas_call(
        functools.partial(_res_block_kernel, groups=n_groups, eps=eps,
                          H=H, W=W, skip_conv=skip_conv),
        out_shape=jax.ShapeDtypeStruct((N, Cout, HW), x.dtype),
        grid=(N,),
        in_specs=in_specs,
        out_specs=pl.BlockSpec((1, Cout, HW), lambda n: (n, 0, 0)),
        compiler_params=pltpu.CompilerParams(dimension_semantics=("parallel",)),
    )(*args)

    return out.reshape(N, Cout, H, W)


# ----------------------------------------------------------------------------
# Pure-JAX reference (mirrors the PyTorch forward) for a sanity check.
# ----------------------------------------------------------------------------
def _reference(x, emb, params, *, n_groups=32, eps=1e-5):
    def gn(v, g, b):
        N, C, H, W = v.shape
        v32 = v.astype(jnp.float32).reshape(N, n_groups, (C // n_groups) * H * W)
        mean = jnp.mean(v32, axis=2, keepdims=True)
        var = jnp.var(v32, axis=2, keepdims=True)
        v32 = (v32 - mean) * jax.lax.rsqrt(var + eps)
        v32 = v32.reshape(N, C, H, W)
        v32 = v32 * g[None, :, None, None] + b[None, :, None, None]
        return v32.astype(v.dtype)

    def silu(v):
        return v * jax.nn.sigmoid(v)

    def conv(v, w, b, pad):
        o = jax.lax.conv_general_dilated(
            v, w, window_strides=(1, 1), padding=((pad, pad), (pad, pad)),
            dimension_numbers=("NCHW", "OIHW", "NCHW"))
        return o + b[None, :, None, None]

    h = conv(silu(gn(x, params["gn1_w"], params["gn1_b"])),
             params["conv1_w"], params["conv1_b"], 1)
    e = silu(emb) @ params["emb_w"].T + params["emb_b"]
    h = h + e[:, :, None, None]
    h = silu(gn(h, params["gn2_w"], params["gn2_b"]))
    h = conv(h, params["conv2_w"], params["conv2_b"], 1)
    Cin, Cout = x.shape[1], h.shape[1]
    if Cout != Cin:
        skip = conv(x, params["skip_w"], params["skip_b"], 0)
    else:
        skip = x
    return skip + h


if __name__ == "__main__":
    # Small shapes consistent with the module: N=2, C=32 -> 64, 16x16 spatial,
    # emb_channels=128, GroupNorm with 32 groups (as in normalization()).
    N, Cin, Cout, E, H, W = 2, 32, 64, 128, 16, 16
    n_groups = 32

    key = jax.random.PRNGKey(0)
    ks = jax.random.split(key, 14)

    def rnd(k, shape, scale=0.1):
        return (scale * jax.random.normal(k, shape)).astype(jnp.float32)

    x = jax.random.normal(ks[0], (N, Cin, H, W), dtype=jnp.float32)
    emb = jax.random.normal(ks[1], (N, E), dtype=jnp.float32)

    # NOTE: conv2 is zero_module()'d at init in PyTorch; random weights here so
    # the test actually exercises the math (forward semantics are unchanged).
    params = dict(
        gn1_w=1.0 + rnd(ks[2], (Cin,)),
        gn1_b=rnd(ks[3], (Cin,)),
        conv1_w=rnd(ks[4], (Cout, Cin, 3, 3)),
        conv1_b=rnd(ks[5], (Cout,)),
        emb_w=rnd(ks[6], (Cout, E)),
        emb_b=rnd(ks[7], (Cout,)),
        gn2_w=1.0 + rnd(ks[8], (Cout,)),
        gn2_b=rnd(ks[9], (Cout,)),
        conv2_w=rnd(ks[10], (Cout, Cout, 3, 3)),
        conv2_b=rnd(ks[11], (Cout,)),
        skip_w=rnd(ks[12], (Cout, Cin, 1, 1)),
        skip_b=rnd(ks[13], (Cout,)),
    )

    out = res_block_forward(x, emb, params, n_groups=n_groups)
    out = jax.block_until_ready(out)

    ref = _reference(x, emb, params, n_groups=n_groups)
    assert out.shape == (N, Cout, H, W)
    assert jnp.allclose(out, ref, atol=1e-3, rtol=1e-3), \
        float(jnp.max(jnp.abs(out - ref)))

    print("KERNEL_OK")
</pallas_src>

<mosaic_0001>
module attributes {stable_mosaic.version = 11 : i64} {
  func.func @_emb_linear_kernel(%arg0: i32, %arg1: memref<2x128xf32, #tpu.memory_space<vmem>>, %arg2: memref<128x64xf32, #tpu.memory_space<vmem>>, %arg3: memref<1x64xf32, #tpu.memory_space<vmem>>, %arg4: memref<2x64xf32, #tpu.memory_space<vmem>>) attributes {dimension_semantics = [#tpu.dimension_semantics<arbitrary>], iteration_bounds = array<i64: 1>, scalar_prefetch = 0 : i64, scratch_operands = 0 : i64, tpu.core_type = #tpu.core_type<tc>, window_params = [{pipeline_mode = #tpu.pipeline_mode<synchronous>, transform_indices = @transform_0, window_bounds = array<i64: 2, 128>}, {pipeline_mode = #tpu.pipeline_mode<synchronous>, transform_indices = @transform_1, window_bounds = array<i64: 128, 64>}, {pipeline_mode = #tpu.pipeline_mode<synchronous>, transform_indices = @transform_2, window_bounds = array<i64: 1, 64>}, {pipeline_mode = #tpu.pipeline_mode<synchronous>, transform_indices = @transform_3, window_bounds = array<i64: 2, 64>}]} {
    %c0 = arith.constant 0 : index
    %c0_0 = arith.constant 0 : index
    %0 = vector.load %arg1[%c0, %c0_0] : memref<2x128xf32, #tpu.memory_space<vmem>>, vector<2x128xf32>
    %1 = arith.negf %0 : vector<2x128xf32>
    %2 = math.exp %1 : vector<2x128xf32>
    %cst = arith.constant 1.000000e+00 : f32
    %3 = vector.broadcast %cst : f32 to vector<2x128xf32>
    %4 = arith.addf %3, %2 : vector<2x128xf32>
    %5 = arith.divf %3, %4 : vector<2x128xf32>
    %6 = arith.mulf %0, %5 : vector<2x128xf32>
    %c0_1 = arith.constant 0 : index
    %c0_2 = arith.constant 0 : index
    %7 = vector.load %arg2[%c0_1, %c0_2] : memref<128x64xf32, #tpu.memory_space<vmem>>, vector<128x64xf32>
    %cst_3 = arith.constant dense<0.000000e+00> : vector<2x64xf32>
    %8 = tpu.matmul %6, %7, %cst_3 {dimension_numbers = #tpu.dot_dimension_numbers<[1], [0], [0], [1], [0, 0, 1, 1], [], []>} : vector<2x128xf32>, vector<128x64xf32>, vector<2x64xf32> -> vector<2x64xf32>
    %c0_4 = arith.constant 0 : index
    %c0_5 = arith.constant 0 : index
    %9 = vector.load %arg3[%c0_4, %c0_5] : memref<1x64xf32, #tpu.memory_space<vmem>>, vector<1x64xf32>
    %10 = vector.broadcast %9 : vector<1x64xf32> to vector<2x64xf32>
    %11 = arith.addf %8, %10 : vector<2x64xf32>
    %c0_6 = arith.constant 0 : index
    %c0_7 = arith.constant 0 : index
    %12 = vector.load %arg4[%c0_6, %c0_7] : memref<2x64xf32, #tpu.memory_space<vmem>>, vector<2x64xf32>
    tpu.vector_store %arg4[%c0_6, %c0_7], %11 {strides = array<i32>} : memref<2x64xf32, #tpu.memory_space<vmem>>, vector<2x64xf32>,
    return
  }
  func.func @transform_0(%arg0: i32) -> (i32, i32) {
    %c0_i32 = arith.constant 0 : i32
    %c0_i32_0 = arith.constant 0 : i32
    %c0_i32_1 = arith.constant 0 : i32
    return %c0_i32, %c0_i32_0 : i32, i32
  }
  func.func @transform_1(%arg0: i32) -> (i32, i32) {
    %c0_i32 = arith.constant 0 : i32
    %c0_i32_0 = arith.constant 0 : i32
    %c0_i32_1 = arith.constant 0 : i32
    return %c0_i32, %c0_i32_0 : i32, i32
  }
  func.func @transform_2(%arg0: i32) -> (i32, i32) {
    %c0_i32 = arith.constant 0 : i32
    %c0_i32_0 = arith.constant 0 : i32
    %c0_i32_1 = arith.constant 0 : i32
    return %c0_i32, %c0_i32_0 : i32, i32
  }
  func.func @transform_3(%arg0: i32) -> (i32, i32) {
    %c0_i32 = arith.constant 0 : i32
    %c0_i32_0 = arith.constant 0 : i32
    %c0_i32_1 = arith.constant 0 : i32
    return %c0_i32, %c0_i32_0 : i32, i32
  }
}

</mosaic_0001>

<llo_original>
// kernel: tpu_custom_call.1
$region0: #{tpu_custom_call.1}
  #allocation0 [shape = 'u32[]', space=smem, size = 0x4, offset = 0x4, fixed_abs, tag = 'smem constant byte address 0x4 - core index']
  #allocation1 [shape = 'u32[72,128]{1,0:T(1,128)}', space=vmem, size = 0x9000, scoped, tag = 'internal scratch']
  %s0 = inlined_call_operand.vmem [shape: f32[2,128], index: 0, kind: input, shape index: {}]
  %s1 = inlined_call_operand.vmem [shape: f32[128,64], index: 1, kind: input, shape index: {}]
  %s2 = inlined_call_operand.vmem [shape: f32[1,64], index: 2, kind: input, shape index: {}]
  %s3 = inlined_call_operand.hbm [shape: f32[2,64], index: 3, kind: output, shape index: {}]
  %s4 = sld [smem:[#allocation0]]
  $region22: #{tpu_custom_call.1} parent=0
    _
  %s6 = ssub.s32 1, %s4
  %s7 = scalar_select 0, %s6, %s4
  $region1: #{tpu_custom_call.1} parent=0
    #allocation2 [shape = 'u8[1024]{0}', space=vmem, size = 0x400, scoped, tag = 'output window, operand 0, single buffered']
    #allocation3 [shape = 's32[1]{0}', space=sflag, size = 0x4, scoped, tag = 'scoped memory for tpu_custom_call.1']
    %8 = vsyncpa [#allocation3], 0
    // Predicated region
    $region2: #{tpu_custom_call.1} parent=1 // pred_check
      _
    $region3: #{tpu_custom_call.1} parent=1 // pred_check_branch
      %10 = sbr.rel (0) target = $region5
    $region4: #{tpu_custom_call.1} parent=1 // pred_region
      _
    $region5: #{tpu_custom_call.1} parent=1 // pred_fallthru
      _
    // Predicated region
    $region6: #{tpu_custom_call.1} parent=1 // pred_check
      _
    $region7: #{tpu_custom_call.1} parent=1 // pred_check_branch
      %12 = sbr.rel (0) target = $region9
    $region8: #{tpu_custom_call.1} parent=1 // pred_region
      _
    $region9: #{tpu_custom_call.1} parent=1 // pred_fallthru
      _
    // Predicated region
    $region10: #{tpu_custom_call.1} parent=1 // pred_check
      _
    $region11: #{tpu_custom_call.1} parent=1 // pred_check_branch
      %14 = sbr.rel (0) target = $region13
    $region12: #{tpu_custom_call.1} parent=1 // pred_region
      _
    $region13: #{tpu_custom_call.1} parent=1 // pred_fallthru
      _
    %v15 = vld [vmem:[%s0] sm:$0x3]
    %v16 = vxor.u32 %v15, 2147483648
    %v17 = vmul.f32 %v16, 1.442695
    %v18 = vpow.pop %v17
    %v19 = vadd.f32 %v18, 1.0
    %v20 = vrcp.pop %v19
    %v21 = vmul.f32 %v19, %v20
    %v22 = vsub.f32 1.0, %v21
    %v23 = vmul.f32 %v20, %v22
    %v24 = vadd.f32 %v20, %v23
    %vm25 = vweird.f32 %v19
    %vm26 = vweird.f32 %v20
    %vm27 = vmor %vm25, %vm26
    %v28 = vsel %vm27, %v20, %v24
    %v29 = vand.u32 2147483647, %v19
    %vm30 = vcmp.eq.f32.partialorder %v29, 8.507059e+37
    %v31 = vand.u32 %v19, 2147483648
    %v32 = vor.u32 1.1754944e-38, %v31
    %v33 = vsel %vm30, %v32, %v28
    %v34 = vmul.f32 1.0, %v33
    %v35 = vmul.f32 %v15, %v34
    %v36 = vld [vmem:[%s1] sm:$0xff]
    %v37 = vld [vmem:[%s1 + $0x8] sm:$0xff]
    %v38 = vld [vmem:[%s1 + $0x10] sm:$0xff]
    %v39 = vld [vmem:[%s1 + $0x18] sm:$0xff]
    %v40 = vld [vmem:[%s1 + $0x20] sm:$0xff]
    %v41 = vld [vmem:[%s1 + $0x28] sm:$0xff]
    %v42 = vld [vmem:[%s1 + $0x30] sm:$0xff]
    %v43 = vld [vmem:[%s1 + $0x38] sm:$0xff]
    %v44 = vld [vmem:[%s1 + $0x40] sm:$0xff]
    %v45 = vld [vmem:[%s1 + $0x48] sm:$0xff]
    %v46 = vld [vmem:[%s1 + $0x50] sm:$0xff]
    %v47 = vld [vmem:[%s1 + $0x58] sm:$0xff]
    %v48 = vld [vmem:[%s1 + $0x60] sm:$0xff]
    %v49 = vld [vmem:[%s1 + $0x68] sm:$0xff]
    %v50 = vld [vmem:[%s1 + $0x70] sm:$0xff]
    %v51 = vld [vmem:[%s1 + $0x78] sm:$0xff]
    %v52 = vld [vmem:[%s2] sm:$0x1]
    %v54 = vperm.slane %v52, 0
    %56 = vmatpush.msra.mxu0 %v51
    %57 = vmatpush.msra.mxu0 %v50
    %58 = vmatpush.msra.mxu0 %v49
    %59 = vmatpush.msra.mxu0 %v48
    %60 = vmatpush.msra.mxu0 %v47
    %61 = vmatpush.msra.mxu0 %v46
    %62 = vmatpush.msra.mxu0 %v45
    %63 = vmatpush.msra.mxu0 %v44
    %64 = vmatpush.msra.mxu0 %v43
    %65 = vmatpush.msra.mxu0 %v42
    %66 = vmatpush.msra.mxu0 %v41
    %67 = vmatpush.msra.mxu0 %v40
    %68 = vmatpush.msra.mxu0 %v39
    %69 = vmatpush.msra.mxu0 %v38
    %70 = vmatpush.msra.mxu0 %v37
    %71 = vmatpush.msra.mxu0 %v36
    %72 = vmatmul.f32.gmra.mxu0 %v35
    %v73 = vpop.f32.mrf.mxu0
    %v74 = vadd.f32 %v54, %v73
    %75 = vdwg.mxu0
    %vm76 = vcmask 517120
    %77 = vst.msk [vmem:[#allocation2] sm:$0x3] %vm76, %v74
    // Predicated region
    $region14: #{tpu_custom_call.1} parent=1 // pred_check
      _
    $region15: #{tpu_custom_call.1} parent=1 // pred_check_branch
      %79 = sbr.rel (0) target = $region17
    $region16: #{tpu_custom_call.1} parent=1 // pred_region
      %81 = vsyncadd [#allocation3], 0
      %s83 = sshll.u32 [#allocation2], 4
      %s84 = int_to_ptr.vmem [resolvable:$true] %s83
      %s85 = sshll.u32 %s3, 4
      %s86 = int_to_ptr.hbm [resolvable:$true] %s85
      %88 = dma.vmem_to_hbm [thread:$0]  %s84, 32, %s86, [#allocation3]
    $region17: #{tpu_custom_call.1} parent=1 // pred_fallthru
      _
    // Predicated region
    $region18: #{tpu_custom_call.1} parent=1 // pred_check
      _
    $region19: #{tpu_custom_call.1} parent=1 // pred_check_branch
      %90 = sbr.rel (0) target = $region21
    $region20: #{tpu_custom_call.1} parent=1 // pred_region
      %92 = dma.done [#allocation3], 32
    $region21: #{tpu_custom_call.1} parent=1 // pred_fallthru
      _
    %93 = vsyncpa [#allocation3], 1

</llo_original>
